<compile_context>
chip_gen: v5e
topology: v5e:2x2
jax: 0.10.0
libtpu: 0.0.40
codegen_flags: <defaults>
</compile_context>

<pallas_src>
import functools

import jax
import jax.numpy as jnp
from jax.experimental import pallas as pl
from jax.experimental.pallas import tpu as pltpu

_LANE = 128
_SUBLANE = 8
_MAX_BLOCK_ROWS = 512        # (4, 512, 128) f32 = 1 MiB per input per block
_EPS = 1e-7


def _giou_tile(p_ref, t_ref):
    """Per-box GIoU loss on one (4, BR, 128) block pair -> (BR, 128) f32."""
    # Dense per-channel loads: leading-dim index gives contiguous (BR, 128).
    pcx, pcy, pw, ph = p_ref[0], p_ref[1], p_ref[2], p_ref[3]
    tcx, tcy, tw, th = t_ref[0], t_ref[1], t_ref[2], t_ref[3]

    # cxcywh -> xyxy
    px1 = pcx - 0.5 * pw
    py1 = pcy - 0.5 * ph
    px2 = pcx + 0.5 * pw
    py2 = pcy + 0.5 * ph
    tx1 = tcx - 0.5 * tw
    ty1 = tcy - 0.5 * th
    tx2 = tcx + 0.5 * tw
    ty2 = tcy + 0.5 * th

    # Intersection
    iw = jnp.maximum(jnp.minimum(px2, tx2) - jnp.maximum(px1, tx1), 0.0)
    ih = jnp.maximum(jnp.minimum(py2, ty2) - jnp.maximum(py1, ty1), 0.0)
    inter_area = iw * ih

    # Areas / union / IoU
    pred_area = (px2 - px1) * (py2 - py1)
    target_area = (tx2 - tx1) * (ty2 - ty1)
    union_area = pred_area + target_area - inter_area
    iou = inter_area / (union_area + _EPS)

    # Smallest enclosing box
    enc_w = jnp.maximum(px2, tx2) - jnp.minimum(px1, tx1)
    enc_h = jnp.maximum(py2, ty2) - jnp.minimum(py1, ty1)
    enclosing_area = enc_w * enc_h

    giou = iou - (enclosing_area - union_area) / (enclosing_area + _EPS)
    return 1.0 - giou


def _pad_mask(shape, n_valid):
    """True for boxes whose global index < n_valid (lane/sublane padding -> False)."""
    block_rows = shape[0]
    row = jax.lax.broadcasted_iota(jnp.int32, shape, 0)
    lane = jax.lax.broadcasted_iota(jnp.int32, shape, 1)
    gidx = (pl.program_id(0) * block_rows + row) * _LANE + lane
    return gidx < n_valid


def _giou_sum_kernel(n_ref, p_ref, t_ref, psum_ref):
    """Sum-only variant: emits an (8, 128) lane-dense partial sum per tile."""
    loss = _giou_tile(p_ref, t_ref)
    masked = jnp.where(_pad_mask(loss.shape, n_ref[0]), loss, 0.0)
    block_rows = masked.shape[0]
    # Fold sublane groups onto each other (vreg-aligned, VPU adds only).
    psum_ref[...] = masked.reshape(block_rows // _SUBLANE, _SUBLANE, _LANE).sum(axis=0)


def _giou_none_kernel(n_ref, p_ref, t_ref, loss_ref):
    """Per-box variant: writes the (BR, 128) masked loss tile."""
    loss = _giou_tile(p_ref, t_ref)
    loss_ref[...] = jnp.where(_pad_mask(loss.shape, n_ref[0]), loss, 0.0)


@functools.partial(jax.jit, static_argnames=("reduction",))
def giou_loss(preds, targets, reduction="mean"):
    """preds, targets: [N, 4] float32 boxes in (cx, cy, w, h)."""
    n = preds.shape[0]
    rows = max(1, -(-n // _LANE))                                # ceil(n / 128)
    block_rows = min(_MAX_BLOCK_ROWS,
                     ((rows + _SUBLANE - 1) // _SUBLANE) * _SUBLANE)
    rows_pad = ((rows + block_rows - 1) // block_rows) * block_rows
    n_pad = rows_pad * _LANE
    num_tiles = rows_pad // block_rows

    def to_tiled(x):
        # transpose + pad (no zeros+scatter), then split box axis into (rows, 128)
        xt = jnp.transpose(x.astype(jnp.float32))                # (4, n)
        xt = jnp.pad(xt, ((0, 0), (0, n_pad - n)))
        return xt.reshape(4, rows_pad, _LANE)

    p_t = to_tiled(preds)
    t_t = to_tiled(targets)
    n_arr = jnp.asarray([n], dtype=jnp.int32)

    in_specs = [
        pl.BlockSpec((4, block_rows, _LANE), lambda i, n_s: (0, i, 0)),
        pl.BlockSpec((4, block_rows, _LANE), lambda i, n_s: (0, i, 0)),
    ]
    compiler_params = pltpu.CompilerParams(dimension_semantics=("parallel",))

    if reduction in ("mean", "sum"):
        # Skip the per-box output entirely; only tiny partial sums hit HBM.
        psums = pl.pallas_call(
            _giou_sum_kernel,
            out_shape=jax.ShapeDtypeStruct((num_tiles * _SUBLANE, _LANE),
                                           jnp.float32),
            grid_spec=pltpu.PrefetchScalarGridSpec(
                num_scalar_prefetch=1,
                grid=(num_tiles,),
                in_specs=in_specs,
                out_specs=pl.BlockSpec((_SUBLANE, _LANE),
                                       lambda i, n_s: (i, 0)),
            ),
            compiler_params=compiler_params,
        )(n_arr, p_t, t_t)
        total = jnp.sum(psums)
        if reduction == "sum":
            return total
        return total / jnp.float32(n)

    # reduction == 'none': per-box loss in sublane-dense layout, sliced back.
    loss_tiled = pl.pallas_call(
        _giou_none_kernel,
        out_shape=jax.ShapeDtypeStruct((rows_pad, _LANE), jnp.float32),
        grid_spec=pltpu.PrefetchScalarGridSpec(
            num_scalar_prefetch=1,
            grid=(num_tiles,),
            in_specs=in_specs,
            out_specs=pl.BlockSpec((block_rows, _LANE),
                                   lambda i, n_s: (i, 0)),
        ),
        compiler_params=compiler_params,
    )(n_arr, p_t, t_t)
    return loss_tiled.reshape(-1)[:n]


def _giou_loss_ref(preds, targets, reduction="mean"):
    """Pure-JAX reference mirroring the PyTorch module."""
    def to_xyxy(b):
        cx, cy, w, h = b[:, 0], b[:, 1], b[:, 2], b[:, 3]
        return jnp.stack([cx - 0.5 * w, cy - 0.5 * h,
                          cx + 0.5 * w, cy + 0.5 * h], axis=-1)

    p = to_xyxy(preds)
    t = to_xyxy(targets)
    ix1 = jnp.maximum(p[:, 0], t[:, 0])
    iy1 = jnp.maximum(p[:, 1], t[:, 1])
    ix2 = jnp.minimum(p[:, 2], t[:, 2])
    iy2 = jnp.minimum(p[:, 3], t[:, 3])
    inter = jnp.clip(ix2 - ix1, 0) * jnp.clip(iy2 - iy1, 0)
    pa = (p[:, 2] - p[:, 0]) * (p[:, 3] - p[:, 1])
    ta = (t[:, 2] - t[:, 0]) * (t[:, 3] - t[:, 1])
    union = pa + ta - inter
    iou = inter / (union + _EPS)
    ex1 = jnp.minimum(p[:, 0], t[:, 0])
    ey1 = jnp.minimum(p[:, 1], t[:, 1])
    ex2 = jnp.maximum(p[:, 2], t[:, 2])
    ey2 = jnp.maximum(p[:, 3], t[:, 3])
    enc = (ex2 - ex1) * (ey2 - ey1)
    giou = iou - (enc - union) / (enc + _EPS)
    loss = 1.0 - giou
    if reduction == "mean":
        return loss.mean()
    elif reduction == "sum":
        return loss.sum()
    return loss


if __name__ == "__main__":
    key = jax.random.PRNGKey(0)
    k1, k2 = jax.random.split(key)
    N = 8  # number of boxes

    # Deterministic synthetic boxes in (cx, cy, w, h), normalized to [0, 1].
    cxy_p = jax.random.uniform(k1, (N, 2), jnp.float32, 0.2, 0.8)
    wh_p = jax.random.uniform(k1, (N, 2), jnp.float32, 0.05, 0.3)
    cxy_t = jax.random.uniform(k2, (N, 2), jnp.float32, 0.2, 0.8)
    wh_t = jax.random.uniform(k2, (N, 2), jnp.float32, 0.05, 0.3)
    preds = jnp.concatenate([cxy_p, wh_p], axis=-1)
    targets = jnp.concatenate([cxy_t, wh_t], axis=-1)

    out_mean = jax.block_until_ready(giou_loss(preds, targets, reduction="mean"))
    out_sum = jax.block_until_ready(giou_loss(preds, targets, reduction="sum"))
    out_none = jax.block_until_ready(giou_loss(preds, targets, reduction="none"))

    ref_mean = _giou_loss_ref(preds, targets, "mean")
    ref_sum = _giou_loss_ref(preds, targets, "sum")
    ref_none = _giou_loss_ref(preds, targets, "none")

    assert jnp.allclose(out_mean, ref_mean, rtol=1e-5, atol=1e-5), (out_mean, ref_mean)
    assert jnp.allclose(out_sum, ref_sum, rtol=1e-5, atol=1e-5), (out_sum, ref_sum)
    assert jnp.allclose(out_none, ref_none, rtol=1e-5, atol=1e-5)

    print("KERNEL_OK")
</pallas_src>

<mosaic_0001>
module attributes {stable_mosaic.version = 11 : i64} {
  func.func @_giou_sum_kernel(%arg0: i32, %arg1: memref<1xi32, #tpu.memory_space<smem>>, %arg2: memref<4x8x128xf32, #tpu.memory_space<vmem>>, %arg3: memref<4x8x128xf32, #tpu.memory_space<vmem>>, %arg4: memref<8x128xf32, #tpu.memory_space<vmem>>) attributes {dimension_semantics = [#tpu.dimension_semantics<parallel>], iteration_bounds = array<i64: 1>, scalar_prefetch = 1 : i64, scratch_operands = 0 : i64, tpu.core_type = #tpu.core_type<tc>, window_params = [{transform_indices = @transform_0, window_bounds = array<i64: 4, 8, 128>}, {transform_indices = @transform_1, window_bounds = array<i64: 4, 8, 128>}, {transform_indices = @transform_2, window_bounds = array<i64: 8, 128>}]} {
    %c0 = arith.constant 0 : index
    %c0_0 = arith.constant 0 : index
    %c0_1 = arith.constant 0 : index
    %0 = vector.load %arg2[%c0, %c0_0, %c0_1] : memref<4x8x128xf32, #tpu.memory_space<vmem>>, vector<1x8x128xf32>
    %1 = vector.shape_cast %0 : vector<1x8x128xf32> to vector<8x128xf32>
    %c1 = arith.constant 1 : index
    %c0_2 = arith.constant 0 : index
    %c0_3 = arith.constant 0 : index
    %2 = vector.load %arg2[%c1, %c0_2, %c0_3] : memref<4x8x128xf32, #tpu.memory_space<vmem>>, vector<1x8x128xf32>
    %3 = vector.shape_cast %2 : vector<1x8x128xf32> to vector<8x128xf32>
    %c2 = arith.constant 2 : index
    %c0_4 = arith.constant 0 : index
    %c0_5 = arith.constant 0 : index
    %4 = vector.load %arg2[%c2, %c0_4, %c0_5] : memref<4x8x128xf32, #tpu.memory_space<vmem>>, vector<1x8x128xf32>
    %5 = vector.shape_cast %4 : vector<1x8x128xf32> to vector<8x128xf32>
    %c3 = arith.constant 3 : index
    %c0_6 = arith.constant 0 : index
    %c0_7 = arith.constant 0 : index
    %6 = vector.load %arg2[%c3, %c0_6, %c0_7] : memref<4x8x128xf32, #tpu.memory_space<vmem>>, vector<1x8x128xf32>
    %7 = vector.shape_cast %6 : vector<1x8x128xf32> to vector<8x128xf32>
    %c0_8 = arith.constant 0 : index
    %c0_9 = arith.constant 0 : index
    %c0_10 = arith.constant 0 : index
    %8 = vector.load %arg3[%c0_8, %c0_9, %c0_10] : memref<4x8x128xf32, #tpu.memory_space<vmem>>, vector<1x8x128xf32>
    %9 = vector.shape_cast %8 : vector<1x8x128xf32> to vector<8x128xf32>
    %c1_11 = arith.constant 1 : index
    %c0_12 = arith.constant 0 : index
    %c0_13 = arith.constant 0 : index
    %10 = vector.load %arg3[%c1_11, %c0_12, %c0_13] : memref<4x8x128xf32, #tpu.memory_space<vmem>>, vector<1x8x128xf32>
    %11 = vector.shape_cast %10 : vector<1x8x128xf32> to vector<8x128xf32>
    %c2_14 = arith.constant 2 : index
    %c0_15 = arith.constant 0 : index
    %c0_16 = arith.constant 0 : index
    %12 = vector.load %arg3[%c2_14, %c0_15, %c0_16] : memref<4x8x128xf32, #tpu.memory_space<vmem>>, vector<1x8x128xf32>
    %13 = vector.shape_cast %12 : vector<1x8x128xf32> to vector<8x128xf32>
    %c3_17 = arith.constant 3 : index
    %c0_18 = arith.constant 0 : index
    %c0_19 = arith.constant 0 : index
    %14 = vector.load %arg3[%c3_17, %c0_18, %c0_19] : memref<4x8x128xf32, #tpu.memory_space<vmem>>, vector<1x8x128xf32>
    %15 = vector.shape_cast %14 : vector<1x8x128xf32> to vector<8x128xf32>
    %cst = arith.constant 5.000000e-01 : f32
    %16 = vector.broadcast %cst : f32 to vector<8x128xf32>
    %17 = arith.mulf %16, %5 : vector<8x128xf32>
    %18 = arith.subf %1, %17 : vector<8x128xf32>
    %cst_20 = arith.constant 5.000000e-01 : f32
    %19 = vector.broadcast %cst_20 : f32 to vector<8x128xf32>
    %20 = arith.mulf %19, %7 : vector<8x128xf32>
    %21 = arith.subf %3, %20 : vector<8x128xf32>
    %cst_21 = arith.constant 5.000000e-01 : f32
    %22 = vector.broadcast %cst_21 : f32 to vector<8x128xf32>
    %23 = arith.mulf %22, %5 : vector<8x128xf32>
    %24 = arith.addf %1, %23 : vector<8x128xf32>
    %cst_22 = arith.constant 5.000000e-01 : f32
    %25 = vector.broadcast %cst_22 : f32 to vector<8x128xf32>
    %26 = arith.mulf %25, %7 : vector<8x128xf32>
    %27 = arith.addf %3, %26 : vector<8x128xf32>
    %cst_23 = arith.constant 5.000000e-01 : f32
    %28 = vector.broadcast %cst_23 : f32 to vector<8x128xf32>
    %29 = arith.mulf %28, %13 : vector<8x128xf32>
    %30 = arith.subf %9, %29 : vector<8x128xf32>
    %cst_24 = arith.constant 5.000000e-01 : f32
    %31 = vector.broadcast %cst_24 : f32 to vector<8x128xf32>
    %32 = arith.mulf %31, %15 : vector<8x128xf32>
    %33 = arith.subf %11, %32 : vector<8x128xf32>
    %cst_25 = arith.constant 5.000000e-01 : f32
    %34 = vector.broadcast %cst_25 : f32 to vector<8x128xf32>
    %35 = arith.mulf %34, %13 : vector<8x128xf32>
    %36 = arith.addf %9, %35 : vector<8x128xf32>
    %cst_26 = arith.constant 5.000000e-01 : f32
    %37 = vector.broadcast %cst_26 : f32 to vector<8x128xf32>
    %38 = arith.mulf %37, %15 : vector<8x128xf32>
    %39 = arith.addf %11, %38 : vector<8x128xf32>
    %40 = arith.minimumf %24, %36 : vector<8x128xf32>
    %41 = arith.maximumf %18, %30 : vector<8x128xf32>
    %42 = arith.subf %40, %41 : vector<8x128xf32>
    %cst_27 = arith.constant 0.000000e+00 : f32
    %43 = vector.broadcast %cst_27 : f32 to vector<8x128xf32>
    %44 = arith.maximumf %42, %43 : vector<8x128xf32>
    %45 = arith.minimumf %27, %39 : vector<8x128xf32>
    %46 = arith.maximumf %21, %33 : vector<8x128xf32>
    %47 = arith.subf %45, %46 : vector<8x128xf32>
    %cst_28 = arith.constant 0.000000e+00 : f32
    %48 = vector.broadcast %cst_28 : f32 to vector<8x128xf32>
    %49 = arith.maximumf %47, %48 : vector<8x128xf32>
    %50 = arith.mulf %44, %49 : vector<8x128xf32>
    %51 = arith.subf %24, %18 : vector<8x128xf32>
    %52 = arith.subf %27, %21 : vector<8x128xf32>
    %53 = arith.mulf %51, %52 : vector<8x128xf32>
    %54 = arith.subf %36, %30 : vector<8x128xf32>
    %55 = arith.subf %39, %33 : vector<8x128xf32>
    %56 = arith.mulf %54, %55 : vector<8x128xf32>
    %57 = arith.addf %53, %56 : vector<8x128xf32>
    %58 = arith.subf %57, %50 : vector<8x128xf32>
    %cst_29 = arith.constant 1.000000e-07 : f32
    %59 = vector.broadcast %cst_29 : f32 to vector<8x128xf32>
    %60 = arith.addf %58, %59 : vector<8x128xf32>
    %61 = arith.divf %50, %60 : vector<8x128xf32>
    %62 = arith.maximumf %24, %36 : vector<8x128xf32>
    %63 = arith.minimumf %18, %30 : vector<8x128xf32>
    %64 = arith.subf %62, %63 : vector<8x128xf32>
    %65 = arith.maximumf %27, %39 : vector<8x128xf32>
    %66 = arith.minimumf %21, %33 : vector<8x128xf32>
    %67 = arith.subf %65, %66 : vector<8x128xf32>
    %68 = arith.mulf %64, %67 : vector<8x128xf32>
    %69 = arith.subf %68, %58 : vector<8x128xf32>
    %cst_30 = arith.constant 1.000000e-07 : f32
    %70 = vector.broadcast %cst_30 : f32 to vector<8x128xf32>
    %71 = arith.addf %68, %70 : vector<8x128xf32>
    %72 = arith.divf %69, %71 : vector<8x128xf32>
    %73 = arith.subf %61, %72 : vector<8x128xf32>
    %cst_31 = arith.constant 1.000000e+00 : f32
    %74 = vector.broadcast %cst_31 : f32 to vector<8x128xf32>
    %75 = arith.subf %74, %73 : vector<8x128xf32>
    %c0_32 = arith.constant 0 : index
    %76 = memref.load %arg1[%c0_32] : memref<1xi32, #tpu.memory_space<smem>>
    %77 = tpu.iota {dimensions = array<i32: 0>} : vector<8x128xi32>
    %78 = tpu.iota {dimensions = array<i32: 1>} : vector<8x128xi32>
    %c8_i32 = arith.constant 8 : i32
    %79 = arith.muli %arg0, %c8_i32 : i32
    %80 = vector.broadcast %79 : i32 to vector<8x128xi32>
    %81 = arith.addi %80, %77 : vector<8x128xi32>
    %c128_i32 = arith.constant 128 : i32
    %82 = vector.broadcast %c128_i32 : i32 to vector<8x128xi32>
    %83 = arith.muli %81, %82 : vector<8x128xi32>
    %84 = arith.addi %83, %78 : vector<8x128xi32>
    %85 = vector.broadcast %76 : i32 to vector<8x128xi32>
    %86 = arith.cmpi slt, %84, %85 : vector<8x128xi32>
    %cst_33 = arith.constant 0.000000e+00 : f32
    %87 = vector.broadcast %cst_33 : f32 to vector<8x128xf32>
    %88 = arith.select %86, %75, %87 : vector<8x128xi1>, vector<8x128xf32>
    %89 = vector.shape_cast %88 : vector<8x128xf32> to vector<1x8x128xf32>
    %cst_34 = arith.constant dense<0.000000e+00> : vector<8x128xf32>
    %90 = vector.multi_reduction <add>, %89, %cst_34 [0] : vector<1x8x128xf32> to vector<8x128xf32>
    %c0_35 = arith.constant 0 : index
    %c0_36 = arith.constant 0 : index
    %91 = vector.load %arg4[%c0_35, %c0_36] : memref<8x128xf32, #tpu.memory_space<vmem>>, vector<8x128xf32>
    tpu.vector_store %arg4[%c0_35, %c0_36], %90 {strides = array<i32>} : memref<8x128xf32, #tpu.memory_space<vmem>>, vector<8x128xf32>,
    return
  }
  func.func @transform_0(%arg0: i32, %arg1: memref<1xi32, #tpu.memory_space<smem>>) -> (i32, i32, i32) {
    %c0_i32 = arith.constant 0 : i32
    %c0_i32_0 = arith.constant 0 : i32
    %c0_i32_1 = arith.constant 0 : i32
    return %c0_i32, %arg0, %c0_i32_0 : i32, i32, i32
  }
  func.func @transform_1(%arg0: i32, %arg1: memref<1xi32, #tpu.memory_space<smem>>) -> (i32, i32, i32) {
    %c0_i32 = arith.constant 0 : i32
    %c0_i32_0 = arith.constant 0 : i32
    %c0_i32_1 = arith.constant 0 : i32
    return %c0_i32, %arg0, %c0_i32_0 : i32, i32, i32
  }
  func.func @transform_2(%arg0: i32, %arg1: memref<1xi32, #tpu.memory_space<smem>>) -> (i32, i32) {
    %c0_i32 = arith.constant 0 : i32
    %c0_i32_0 = arith.constant 0 : i32
    return %arg0, %c0_i32 : i32, i32
  }
}

</mosaic_0001>

<llo_original>
// kernel: giou_loss.1
$region0: #{giou_loss.1}
  #allocation0 [shape = 'u32[]', space=smem, size = 0x4, offset = 0x4, fixed_abs, tag = 'smem constant byte address 0x4 - core index']
  #allocation1 [shape = 'u32[72,128]{1,0:T(1,128)}', space=vmem, size = 0x9000, scoped, tag = 'internal scratch']
  #allocation2 [shape = 's32[1]{0}', space=sflag, size = 0x4, scoped, tag = 'scoped memory for giou_loss.1']
  #allocation3 [shape = 's32[1]{0:T(128)S(6)}', space=smem, size = 0x200, scoped, tag = 'prefetched SMEM operand 0']
  %s0 = inlined_call_operand.<no memory space> [shape: s32[1], index: 0, kind: input, shape index: {}]
  %s1 = inlined_call_operand.vmem [shape: f32[4,8,128], index: 1, kind: input, shape index: {}]
  %s2 = inlined_call_operand.vmem [shape: f32[4,8,128], index: 2, kind: input, shape index: {}]
  %s3 = inlined_call_operand.vmem [shape: f32[8,128], index: 3, kind: output, shape index: {}]
  %s4 = sld [smem:[#allocation0]]
  $region18: #{giou_loss.1} parent=0
    _
  %s6 = ssub.s32 1, %s4
  %s7 = scalar_select 0, %s6, %s4
  %8 = sst [smem:[#allocation3]] %s0
  // Predicated region
  $region2: #{giou_loss.1} parent=0 // pred_check
    _
  $region3: #{giou_loss.1} parent=0 // pred_check_branch
    %10 = sbr.rel (0) target = $region5
  $region4: #{giou_loss.1} parent=0 // pred_region
    _
  $region5: #{giou_loss.1} parent=0 // pred_fallthru
    _
  // Predicated region
  $region6: #{giou_loss.1} parent=0 // pred_check
    _
  $region7: #{giou_loss.1} parent=0 // pred_check_branch
    %12 = sbr.rel (0) target = $region9
  $region8: #{giou_loss.1} parent=0 // pred_region
    _
  $region9: #{giou_loss.1} parent=0 // pred_fallthru
    _
  %v13 = vld [vmem:[%s1] sm:$0xff]
  %s14 = scalar_lea.vmem %s1, 8
  %v15 = vld [vmem:[%s14] sm:$0xff]
  %s16 = scalar_lea.vmem %s1, 16
  %v17 = vld [vmem:[%s16] sm:$0xff]
  %s18 = scalar_lea.vmem %s1, 24
  %v19 = vld [vmem:[%s18] sm:$0xff]
  %v20 = vld [vmem:[%s2] sm:$0xff]
  %s21 = scalar_lea.vmem %s2, 8
  %v22 = vld [vmem:[%s21] sm:$0xff]
  %s23 = scalar_lea.vmem %s2, 16
  %v24 = vld [vmem:[%s23] sm:$0xff]
  %s25 = scalar_lea.vmem %s2, 24
  %v26 = vld [vmem:[%s25] sm:$0xff]
  %v27 = vmul.f32 %v17, 0.5
  %v28 = vsub.f32 %v13, %v27
  %v29 = vmul.f32 %v19, 0.5
  %v30 = vsub.f32 %v15, %v29
  %v31 = vadd.f32 %v13, %v27
  %v32 = vadd.f32 %v15, %v29
  %v33 = vmul.f32 %v24, 0.5
  %v34 = vsub.f32 %v20, %v33
  %v35 = vmul.f32 %v26, 0.5
  %v36 = vsub.f32 %v22, %v35
  %v37 = vadd.f32 %v20, %v33
  %v38 = vadd.f32 %v22, %v35
  %v39 = vmin.f32 %v31, %v37
  %v40 = vmax.f32 %v28, %v34
  %v41 = vsub.f32 %v39, %v40
  %v42 = vmax.f32 %v41, 0.0
  %v43 = vmin.f32 %v32, %v38
  %v44 = vmax.f32 %v30, %v36
  %v45 = vsub.f32 %v43, %v44
  %v46 = vmax.f32 %v45, 0.0
  %v47 = vmul.f32 %v42, %v46
  %v48 = vsub.f32 %v31, %v28
  %v49 = vsub.f32 %v32, %v30
  %v50 = vmul.f32 %v48, %v49
  %v51 = vsub.f32 %v37, %v34
  %v52 = vsub.f32 %v38, %v36
  %v53 = vmul.f32 %v51, %v52
  %v54 = vadd.f32 %v50, %v53
  %v55 = vsub.f32 %v54, %v47
  %v56 = vadd.f32 %v55, 1e-07
  %v57 = vrcp.pop %v56
  %v58 = vmul.f32 %v56, %v57
  %v59 = vsub.f32 1.0, %v58
  %v60 = vmul.f32 %v57, %v59
  %v61 = vadd.f32 %v57, %v60
  %vm62 = vweird.f32 %v56
  %vm63 = vweird.f32 %v57
  %vm64 = vmor %vm62, %vm63
  %v65 = vsel %vm64, %v57, %v61
  %v66 = vand.u32 2147483647, %v56
  %vm67 = vcmp.eq.f32.partialorder %v66, 8.507059e+37
  %v68 = vand.u32 %v56, 2147483648
  %v69 = vor.u32 1.1754944e-38, %v68
  %v70 = vsel %vm67, %v69, %v65
  %v71 = vmul.f32 %v47, %v70
  %v72 = vmax.f32 %v31, %v37
  %v73 = vmin.f32 %v28, %v34
  %v74 = vsub.f32 %v72, %v73
  %v75 = vmax.f32 %v32, %v38
  %v76 = vmin.f32 %v30, %v36
  %v77 = vsub.f32 %v75, %v76
  %v78 = vmul.f32 %v74, %v77
  %v79 = vsub.f32 %v78, %v55
  %v80 = vadd.f32 %v78, 1e-07
  %v81 = vrcp.pop %v80
  %v82 = vmul.f32 %v80, %v81
  %v83 = vsub.f32 1.0, %v82
  %v84 = vmul.f32 %v81, %v83
  %v85 = vadd.f32 %v81, %v84
  %vm86 = vweird.f32 %v80
  %vm87 = vweird.f32 %v81
  %vm88 = vmor %vm86, %vm87
  %v89 = vsel %vm88, %v81, %v85
  %v90 = vand.u32 2147483647, %v80
  %vm91 = vcmp.eq.f32.partialorder %v90, 8.507059e+37
  %v92 = vand.u32 %v80, 2147483648
  %v93 = vor.u32 1.1754944e-38, %v92
  %v94 = vsel %vm91, %v93, %v89
  %v95 = vmul.f32 %v79, %v94
  %v96 = vsub.f32 %v71, %v95
  %v97 = vsub.f32 1.0, %v96
  %s98 = sld [smem:[#allocation3]]
  %v99 = vlaneseq
  %v100 = vshrl.u32 %v99, 7
  %v101 = vlaneseq
  %v102 = vand.u32 %v101, 127
  %s103 = smul.u32 0, 8
  %v104 = vstv %s103
  %v105 = vadd.s32 %v104, %v100
  %v106 = vmul.u32 %v105, 128
  %v107 = vadd.s32 %v106, %v102
  %v108 = vstv %s98
  %vm109 = vcmp.lt.s32.totalorder %v107, %v108
  %v110 = vsel %vm109, %v97, 0.0
  %v111 = vadd.f32 %v110, 0.0
  %112 = vst [vmem:[%s3] sm:$0xff] %v111
  // Predicated region
  $region10: #{giou_loss.1} parent=0 // pred_check
    _
  $region11: #{giou_loss.1} parent=0 // pred_check_branch
    %114 = sbr.rel (0) target = $region13
  $region12: #{giou_loss.1} parent=0 // pred_region
    _
  $region13: #{giou_loss.1} parent=0 // pred_fallthru
    _
  // Predicated region
  $region14: #{giou_loss.1} parent=0 // pred_check
    _
  $region15: #{giou_loss.1} parent=0 // pred_check_branch
    %116 = sbr.rel (0) target = $region17
  $region16: #{giou_loss.1} parent=0 // pred_region
    _
  $region17: #{giou_loss.1} parent=0 // pred_fallthru
    _

</llo_original>
